<compile_context>
chip_gen: v5e
topology: v5e:2x2
jax: 0.10.0
libtpu: 0.0.40
codegen_flags: <defaults>
</compile_context>

<pallas_src>
import functools

import jax
import jax.numpy as jnp
from jax.experimental import pallas as pl
from jax.experimental.pallas import tpu as pltpu

NEG_BIG = -1.0e30  # finite stand-in for -inf on padded vocab columns


def _round_up(x, m):
    return ((x + m - 1) // m) * m


def _pick_vocab_tile(v_pad, max_tile):
    """Largest multiple of 128 that divides v_pad and is <= max_tile."""
    t = min(v_pad, max_tile)
    while v_pad % t != 0:
        t -= 128
    return t


def fnnlm_kernel(x_ref, w1_ref, b1_ref, w2_ref, b2_ref, out_ref,
                 hidden_ref, m_ref, l_ref):
    """Grid = (batch tiles [parallel], vocab tiles [arbitrary]).

    Output block is resident in VMEM across the vocab axis; raw logits are
    stashed per vocab tile and normalized with an online log-sum-exp on the
    last vocab step.
    """
    j = pl.program_id(1)
    nv = pl.num_programs(1)
    tv = w2_ref.shape[1]

    # First vocab step for this batch tile: hidden layer + accumulator reset.
    @pl.when(j == 0)
    def _():
        h = jnp.tanh(
            jnp.dot(x_ref[...], w1_ref[...],
                    preferred_element_type=jnp.float32)
            + b1_ref[...]                                   # [1, H_pad] broadcast
        )                                                   # [tb, H_pad] f32
        hidden_ref[...] = h.astype(hidden_ref.dtype)        # bf16 for the MXU
        m_ref[...] = jnp.full(m_ref.shape, -jnp.inf, m_ref.dtype)
        l_ref[...] = jnp.zeros(l_ref.shape, l_ref.dtype)

    # Current vocab tile of logits (bf16 operands, f32 accumulation).
    logits = (
        jnp.dot(hidden_ref[...], w2_ref[...],
                preferred_element_type=jnp.float32)
        + b2_ref[...]                                       # [1, tv] broadcast
    )                                                       # [tb, tv] f32

    # Stash raw logits into the VMEM-resident output tile.
    col = pl.multiple_of(j * tv, 128)
    out_ref[:, pl.ds(col, tv)] = logits

    # Online log-sum-exp accumulation (flash-softmax style running max/sum).
    m_prev = m_ref[...]
    m_new = jnp.maximum(m_prev, jnp.max(logits, axis=-1, keepdims=True))
    l_ref[...] = (l_ref[...] * jnp.exp(m_prev - m_new)
                  + jnp.sum(jnp.exp(logits - m_new), axis=-1, keepdims=True))
    m_ref[...] = m_new

    # Final vocab step: log_softmax = logits - m - log(sum exp(logits - m)).
    @pl.when(j == nv - 1)
    def _():
        out_ref[...] = out_ref[...] - (m_ref[...] + jnp.log(l_ref[...]))


@functools.partial(jax.jit, static_argnames=("batch_tile", "max_vocab_tile"))
def fnnlm_forward(tokens, emb_table, w1_t, b1, w2_t, b2,
                  *, batch_tile=128, max_vocab_tile=2048):
    """Full forward pass of FeedForwardNNLM.

    tokens    : int32 [B, window_size]
    emb_table : f32   [vocab_size, embedding_dim]
    w1_t      : f32   [window_size*embedding_dim, hidden_dim]   (e2h.weight.T)
    b1        : f32   [hidden_dim]
    w2_t      : f32   [hidden_dim, vocab_size]                  (h2o.weight.T)
    b2        : f32   [vocab_size]
    returns   : f32   [B, vocab_size]  log-probabilities
    """
    B, W = tokens.shape
    _, E = emb_table.shape
    D_in = W * E
    H = w1_t.shape[1]
    V = w2_t.shape[1]

    # glue: embedding gather + flatten (matches embeddings(inputs).reshape(B, -1))
    # TODO(synk): move the gather in-kernel (scalar-prefetch + DMA) to avoid the
    # materialized [B, D_in] intermediate HBM round-trip.
    embeds = emb_table[tokens].reshape(B, D_in)

    # ---- pad to hardware-friendly shapes (all zero-pads are mathematical no-ops,
    #      padded vocab columns get a huge negative bias so exp() of them is 0). ----
    tb = max(8, int(batch_tile))
    B_pad = _round_up(B, tb)
    H_pad = _round_up(H, 128)
    V_pad = _round_up(V, 128)
    tv = _pick_vocab_tile(V_pad, max_vocab_tile)

    embeds_p = jnp.zeros((B_pad, D_in), jnp.bfloat16).at[:B].set(
        embeds.astype(jnp.bfloat16))
    w1_p = jnp.zeros((D_in, H_pad), jnp.bfloat16).at[:, :H].set(
        w1_t.astype(jnp.bfloat16))
    b1_p = jnp.zeros((1, H_pad), jnp.float32).at[0, :H].set(
        b1.astype(jnp.float32))
    w2_p = jnp.zeros((H_pad, V_pad), jnp.bfloat16).at[:H, :V].set(
        w2_t.astype(jnp.bfloat16))
    b2_p = jnp.full((1, V_pad), NEG_BIG, jnp.float32).at[0, :V].set(
        b2.astype(jnp.float32))

    grid = (B_pad // tb, V_pad // tv)

    flops = 2 * B_pad * (D_in * H_pad + H_pad * V_pad)
    transcendentals = B_pad * (H_pad + V_pad)
    bytes_accessed = (embeds_p.size * 2 + w1_p.size * 2
                      + w2_p.size * 2 * grid[0]        # W2 re-streamed per batch tile
                      + B_pad * V_pad * 4 + H_pad * 4 + V_pad * 4)

    out = pl.pallas_call(
        fnnlm_kernel,
        out_shape=jax.ShapeDtypeStruct((B_pad, V_pad), jnp.float32),
        grid_spec=pltpu.PrefetchScalarGridSpec(
            num_scalar_prefetch=0,
            grid=grid,
            in_specs=[
                pl.BlockSpec((tb, D_in), lambda i, j: (i, 0)),      # activations (batch-tiled)
                pl.BlockSpec((D_in, H_pad), lambda i, j: (0, 0)),   # W1 resident
                pl.BlockSpec((1, H_pad), lambda i, j: (0, 0)),      # b1 resident
                pl.BlockSpec((H_pad, tv), lambda i, j: (0, j)),     # W2 streamed over vocab
                pl.BlockSpec((1, tv), lambda i, j: (0, j)),         # b2 streamed over vocab
            ],
            out_specs=pl.BlockSpec((tb, V_pad), lambda i, j: (i, 0)),  # resident over vocab axis
            scratch_shapes=[
                pltpu.VMEM((tb, H_pad), jnp.bfloat16),   # hidden activations
                pltpu.VMEM((tb, 1), jnp.float32),        # running max
                pltpu.VMEM((tb, 1), jnp.float32),        # running sum(exp)
            ],
        ),
        compiler_params=pltpu.CompilerParams(
            dimension_semantics=("parallel", "arbitrary"),
            vmem_limit_bytes=48 * 1024 * 1024,
        ),
        cost_estimate=pl.CostEstimate(
            flops=flops,
            transcendentals=transcendentals,
            bytes_accessed=bytes_accessed,
        ),
    )(embeds_p, w1_p, b1_p, w2_p, b2_p)

    return out[:B, :V]


def reference_forward(tokens, emb_table, w1_t, b1, w2_t, b2):
    """Pure-JAX f32 reference mirroring the PyTorch module."""
    B = tokens.shape[0]
    embeds = emb_table[tokens].reshape(B, -1)
    hidden = jnp.tanh(embeds @ w1_t + b1)
    logits = hidden @ w2_t + b2
    return jax.nn.log_softmax(logits, axis=1)


if __name__ == "__main__":
    # Hyperparameters implied by the module's __init__ (opt) — small test sizes.
    vocab_size = 256
    embedding_dim = 16
    window_size = 4
    hidden_dim = 32
    batch = 16

    key = jax.random.PRNGKey(0)
    k_tok, k_emb, k_w1, k_b1, k_w2, k_b2 = jax.random.split(key, 6)

    tokens = jax.random.randint(k_tok, (batch, window_size), 0, vocab_size,
                                dtype=jnp.int32)
    emb_table = jax.random.normal(k_emb, (vocab_size, embedding_dim), jnp.float32) * 0.1
    # nn.Linear stores weight as [out, in]; pre-transposed in the wrapper glue.
    w1 = jax.random.normal(k_w1, (hidden_dim, window_size * embedding_dim),
                           jnp.float32) * 0.1
    b1 = jax.random.normal(k_b1, (hidden_dim,), jnp.float32) * 0.1
    w2 = jax.random.normal(k_w2, (vocab_size, hidden_dim), jnp.float32) * 0.1
    b2 = jax.random.normal(k_b2, (vocab_size,), jnp.float32) * 0.1

    ref = reference_forward(tokens, emb_table, w1.T, b1, w2.T, b2)

    # Default path: big (padded) batch tile, single vocab tile.
    out1 = jax.block_until_ready(
        fnnlm_forward(tokens, emb_table, w1.T, b1, w2.T, b2))

    # Multi-tile path: several batch tiles and two vocab tiles, to exercise the
    # online log-softmax accumulation across vocab tiles.
    out2 = jax.block_until_ready(
        fnnlm_forward(tokens, emb_table, w1.T, b1, w2.T, b2,
                      batch_tile=8, max_vocab_tile=128))

    assert out1.shape == (batch, vocab_size)
    assert out2.shape == (batch, vocab_size)
    # bf16 matmul operands -> relaxed tolerance vs the pure-f32 reference.
    assert jnp.allclose(out1, ref, atol=1e-2, rtol=1e-2), "mismatch (default tiling)"
    assert jnp.allclose(out2, ref, atol=1e-2, rtol=1e-2), "mismatch (vocab-tiled)"
    assert jnp.allclose(out1, out2, atol=2e-3, rtol=2e-3), "tiling-dependent result"
    # rows of log-probs should sum to 1 after exp
    assert jnp.allclose(jnp.exp(out1).sum(axis=1), 1.0, atol=1e-3)
    assert jnp.allclose(jnp.exp(out2).sum(axis=1), 1.0, atol=1e-3)

    print("KERNEL_OK")
</pallas_src>

<mosaic_0001>
module attributes {stable_mosaic.version = 11 : i64} {
  func.func @fnnlm_kernel(%arg0: i32, %arg1: i32, %arg2: memref<128x64xbf16, #tpu.memory_space<vmem>>, %arg3: memref<64x128xbf16, #tpu.memory_space<vmem>>, %arg4: memref<1x128xf32, #tpu.memory_space<vmem>>, %arg5: memref<128x256xbf16, #tpu.memory_space<vmem>>, %arg6: memref<1x256xf32, #tpu.memory_space<vmem>>, %arg7: memref<128x256xf32, #tpu.memory_space<vmem>>, %arg8: memref<128x128xbf16, #tpu.memory_space<vmem>>, %arg9: memref<128x1xf32, #tpu.memory_space<vmem>>, %arg10: memref<128x1xf32, #tpu.memory_space<vmem>>) attributes {dimension_semantics = [#tpu.dimension_semantics<parallel>, #tpu.dimension_semantics<arbitrary>], iteration_bounds = array<i64: 1, 1>, scalar_prefetch = 0 : i64, scratch_operands = 3 : i64, tpu.core_type = #tpu.core_type<tc>, window_params = [{transform_indices = @transform_0, window_bounds = array<i64: 128, 64>}, {pipeline_mode = #tpu.pipeline_mode<synchronous>, transform_indices = @transform_1, window_bounds = array<i64: 64, 128>}, {pipeline_mode = #tpu.pipeline_mode<synchronous>, transform_indices = @transform_2, window_bounds = array<i64: 1, 128>}, {transform_indices = @transform_3, window_bounds = array<i64: 128, 256>}, {transform_indices = @transform_4, window_bounds = array<i64: 1, 256>}, {transform_indices = @transform_5, window_bounds = array<i64: 128, 256>}]} {
    %c0_i32 = arith.constant 0 : i32
    %0 = arith.cmpi eq, %arg1, %c0_i32 : i32
    %1 = arith.extui %0 : i1 to i32
    %c0_i32_0 = arith.constant 0 : i32
    %2 = arith.cmpi ne, %1, %c0_i32_0 : i32
    scf.if %2 {
      %c0_19 = arith.constant 0 : index
      %c0_20 = arith.constant 0 : index
      %32 = vector.load %arg2[%c0_19, %c0_20] : memref<128x64xbf16, #tpu.memory_space<vmem>>, vector<128x64xbf16>
      %c0_21 = arith.constant 0 : index
      %c0_22 = arith.constant 0 : index
      %33 = vector.load %arg3[%c0_21, %c0_22] : memref<64x128xbf16, #tpu.memory_space<vmem>>, vector<64x128xbf16>
      %cst_23 = arith.constant dense<0.000000e+00> : vector<128x128xf32>
      %34 = tpu.matmul %32, %33, %cst_23 {dimension_numbers = #tpu.dot_dimension_numbers<[1], [0], [0], [1], [0, 0, 1, 1], [], []>} : vector<128x64xbf16>, vector<64x128xbf16>, vector<128x128xf32> -> vector<128x128xf32>
      %c0_24 = arith.constant 0 : index
      %c0_25 = arith.constant 0 : index
      %35 = vector.load %arg4[%c0_24, %c0_25] : memref<1x128xf32, #tpu.memory_space<vmem>>, vector<1x128xf32>
      %36 = vector.broadcast %35 : vector<1x128xf32> to vector<128x128xf32>
      %37 = arith.addf %34, %36 : vector<128x128xf32>
      %38 = math.tanh %37 : vector<128x128xf32>
      %39 = arith.truncf %38 : vector<128x128xf32> to vector<128x128xbf16>
      %c0_26 = arith.constant 0 : index
      %c0_27 = arith.constant 0 : index
      %40 = vector.load %arg8[%c0_26, %c0_27] : memref<128x128xbf16, #tpu.memory_space<vmem>>, vector<128x128xbf16>
      tpu.vector_store %arg8[%c0_26, %c0_27], %39 {strides = array<i32>} : memref<128x128xbf16, #tpu.memory_space<vmem>>, vector<128x128xbf16>,
      %cst_28 = arith.constant 0xFF800000 : f32
      %41 = vector.broadcast %cst_28 : f32 to vector<128x1xf32>
      %c0_29 = arith.constant 0 : index
      %c0_30 = arith.constant 0 : index
      %42 = vector.load %arg9[%c0_29, %c0_30] : memref<128x1xf32, #tpu.memory_space<vmem>>, vector<128x1xf32>
      tpu.vector_store %arg9[%c0_29, %c0_30], %41 {strides = array<i32>} : memref<128x1xf32, #tpu.memory_space<vmem>>, vector<128x1xf32>,
      %cst_31 = arith.constant 0.000000e+00 : f32
      %43 = vector.broadcast %cst_31 : f32 to vector<128x1xf32>
      %c0_32 = arith.constant 0 : index
      %c0_33 = arith.constant 0 : index
      %44 = vector.load %arg10[%c0_32, %c0_33] : memref<128x1xf32, #tpu.memory_space<vmem>>, vector<128x1xf32>
      tpu.vector_store %arg10[%c0_32, %c0_33], %43 {strides = array<i32>} : memref<128x1xf32, #tpu.memory_space<vmem>>, vector<128x1xf32>,
    } else {
    }
    %c0 = arith.constant 0 : index
    %c0_1 = arith.constant 0 : index
    %3 = vector.load %arg8[%c0, %c0_1] : memref<128x128xbf16, #tpu.memory_space<vmem>>, vector<128x128xbf16>
    %c0_2 = arith.constant 0 : index
    %c0_3 = arith.constant 0 : index
    %4 = vector.load %arg5[%c0_2, %c0_3] : memref<128x256xbf16, #tpu.memory_space<vmem>>, vector<128x256xbf16>
    %cst = arith.constant dense<0.000000e+00> : vector<128x256xf32>
    %5 = tpu.matmul %3, %4, %cst {dimension_numbers = #tpu.dot_dimension_numbers<[1], [0], [0], [1], [0, 0, 1, 1], [], []>} : vector<128x128xbf16>, vector<128x256xbf16>, vector<128x256xf32> -> vector<128x256xf32>
    %c0_4 = arith.constant 0 : index
    %c0_5 = arith.constant 0 : index
    %6 = vector.load %arg6[%c0_4, %c0_5] : memref<1x256xf32, #tpu.memory_space<vmem>>, vector<1x256xf32>
    %7 = vector.broadcast %6 : vector<1x256xf32> to vector<128x256xf32>
    %8 = arith.addf %5, %7 : vector<128x256xf32>
    %c256_i32 = arith.constant 256 : i32
    %9 = arith.muli %arg1, %c256_i32 : i32
    %10 = tpu.assume_multiple %9, 128 : i32
    %c0_6 = arith.constant 0 : index
    %11 = arith.index_cast %10 : i32 to index
    %12 = vector.load %arg7[%c0_6, %11] : memref<128x256xf32, #tpu.memory_space<vmem>>, vector<128x256xf32>
    tpu.vector_store %arg7[%c0_6, %11], %8 {strides = array<i32>} : memref<128x256xf32, #tpu.memory_space<vmem>>, vector<128x256xf32>,
    %c0_7 = arith.constant 0 : index
    %c0_8 = arith.constant 0 : index
    %13 = vector.load %arg9[%c0_7, %c0_8] : memref<128x1xf32, #tpu.memory_space<vmem>>, vector<128x1xf32>
    %cst_9 = arith.constant dense<0xFF800000> : vector<128xf32>
    %14 = vector.multi_reduction <maximumf>, %8, %cst_9 [1] : vector<128x256xf32> to vector<128xf32>
    %15 = vector.shape_cast %14 : vector<128xf32> to vector<128x1xf32>
    %16 = arith.maximumf %13, %15 : vector<128x1xf32>
    %c0_10 = arith.constant 0 : index
    %c0_11 = arith.constant 0 : index
    %17 = vector.load %arg10[%c0_10, %c0_11] : memref<128x1xf32, #tpu.memory_space<vmem>>, vector<128x1xf32>
    %18 = arith.subf %13, %16 : vector<128x1xf32>
    %19 = math.exp %18 : vector<128x1xf32>
    %20 = arith.mulf %17, %19 : vector<128x1xf32>
    %21 = vector.broadcast %16 : vector<128x1xf32> to vector<128x256xf32>
    %22 = arith.subf %8, %21 : vector<128x256xf32>
    %23 = math.exp %22 : vector<128x256xf32>
    %cst_12 = arith.constant dense<0.000000e+00> : vector<128xf32>
    %24 = vector.multi_reduction <add>, %23, %cst_12 [1] : vector<128x256xf32> to vector<128xf32>
    %25 = vector.shape_cast %24 : vector<128xf32> to vector<128x1xf32>
    %26 = arith.addf %20, %25 : vector<128x1xf32>
    %c0_13 = arith.constant 0 : index
    %c0_14 = arith.constant 0 : index
    %27 = vector.load %arg10[%c0_13, %c0_14] : memref<128x1xf32, #tpu.memory_space<vmem>>, vector<128x1xf32>
    tpu.vector_store %arg10[%c0_13, %c0_14], %26 {strides = array<i32>} : memref<128x1xf32, #tpu.memory_space<vmem>>, vector<128x1xf32>,
    %c0_15 = arith.constant 0 : index
    %c0_16 = arith.constant 0 : index
    %28 = vector.load %arg9[%c0_15, %c0_16] : memref<128x1xf32, #tpu.memory_space<vmem>>, vector<128x1xf32>
    tpu.vector_store %arg9[%c0_15, %c0_16], %16 {strides = array<i32>} : memref<128x1xf32, #tpu.memory_space<vmem>>, vector<128x1xf32>,
    %c0_i32_17 = arith.constant 0 : i32
    %29 = arith.cmpi eq, %arg1, %c0_i32_17 : i32
    %30 = arith.extui %29 : i1 to i32
    %c0_i32_18 = arith.constant 0 : i32
    %31 = arith.cmpi ne, %30, %c0_i32_18 : i32
    scf.if %31 {
      %c0_19 = arith.constant 0 : index
      %c0_20 = arith.constant 0 : index
      %32 = vector.load %arg7[%c0_19, %c0_20] : memref<128x256xf32, #tpu.memory_space<vmem>>, vector<128x256xf32>
      %c0_21 = arith.constant 0 : index
      %c0_22 = arith.constant 0 : index
      %33 = vector.load %arg9[%c0_21, %c0_22] : memref<128x1xf32, #tpu.memory_space<vmem>>, vector<128x1xf32>
      %c0_23 = arith.constant 0 : index
      %c0_24 = arith.constant 0 : index
      %34 = vector.load %arg10[%c0_23, %c0_24] : memref<128x1xf32, #tpu.memory_space<vmem>>, vector<128x1xf32>
      %35 = math.log %34 : vector<128x1xf32>
      %36 = arith.addf %33, %35 : vector<128x1xf32>
      %37 = vector.broadcast %36 : vector<128x1xf32> to vector<128x256xf32>
      %38 = arith.subf %32, %37 : vector<128x256xf32>
      %c0_25 = arith.constant 0 : index
      %c0_26 = arith.constant 0 : index
      %39 = vector.load %arg7[%c0_25, %c0_26] : memref<128x256xf32, #tpu.memory_space<vmem>>, vector<128x256xf32>
      tpu.vector_store %arg7[%c0_25, %c0_26], %38 {strides = array<i32>} : memref<128x256xf32, #tpu.memory_space<vmem>>, vector<128x256xf32>,
    } else {
    }
    return
  }
  func.func @transform_0(%arg0: i32, %arg1: i32) -> (i32, i32) {
    %c0_i32 = arith.constant 0 : i32
    %c0_i32_0 = arith.constant 0 : i32
    return %arg0, %c0_i32 : i32, i32
  }
  func.func @transform_1(%arg0: i32, %arg1: i32) -> (i32, i32) {
    %c0_i32 = arith.constant 0 : i32
    %c0_i32_0 = arith.constant 0 : i32
    %c0_i32_1 = arith.constant 0 : i32
    return %c0_i32, %c0_i32_0 : i32, i32
  }
  func.func @transform_2(%arg0: i32, %arg1: i32) -> (i32, i32) {
    %c0_i32 = arith.constant 0 : i32
    %c0_i32_0 = arith.constant 0 : i32
    %c0_i32_1 = arith.constant 0 : i32
    return %c0_i32, %c0_i32_0 : i32, i32
  }
  func.func @transform_3(%arg0: i32, %arg1: i32) -> (i32, i32) {
    %c0_i32 = arith.constant 0 : i32
    %c0_i32_0 = arith.constant 0 : i32
    return %c0_i32, %arg1 : i32, i32
  }
  func.func @transform_4(%arg0: i32, %arg1: i32) -> (i32, i32) {
    %c0_i32 = arith.constant 0 : i32
    %c0_i32_0 = arith.constant 0 : i32
    return %c0_i32, %arg1 : i32, i32
  }
  func.func @transform_5(%arg0: i32, %arg1: i32) -> (i32, i32) {
    %c0_i32 = arith.constant 0 : i32
    %c0_i32_0 = arith.constant 0 : i32
    return %arg0, %c0_i32 : i32, i32
  }
}

</mosaic_0001>

<llo_original>
// kernel: fnnlm_forward.1
$region0: #{fnnlm_forward.1}
  #allocation0 [shape = 'u32[]', space=smem, size = 0x4, offset = 0x4, fixed_abs, tag = 'smem constant byte address 0x4 - core index']
  #allocation1 [shape = 'u32[72,128]{1,0:T(1,128)}', space=vmem, size = 0x9000, scoped, tag = 'internal scratch']
  #allocation2 [shape = 'bf16[128,128]{1,0:T(8,128)(2,1)}', space=vmem, size = 0x8000, scoped, tag = 'scratch operand']
  #allocation3 [shape = 'f32[128,1]{1,0:T(8,128)}', space=vmem, size = 0x10000, scoped, tag = 'scratch operand']
  #allocation4 [shape = 'f32[128,1]{1,0:T(8,128)}', space=vmem, size = 0x10000, scoped, tag = 'scratch operand']
  %s0 = inlined_call_operand.vmem [shape: bf16[128,64], index: 0, kind: input, shape index: {}]
  %s1 = inlined_call_operand.vmem [shape: bf16[64,128], index: 1, kind: input, shape index: {}]
  %s2 = inlined_call_operand.vmem [shape: f32[1,128], index: 2, kind: input, shape index: {}]
  %s3 = inlined_call_operand.vmem [shape: bf16[128,256], index: 3, kind: input, shape index: {}]
  %s4 = inlined_call_operand.vmem [shape: f32[1,256], index: 4, kind: input, shape index: {}]
  %s5 = inlined_call_operand.vmem [shape: f32[128,256], index: 5, kind: output, shape index: {}]
  %s6 = sld [smem:[#allocation0]]
  $region38: #{fnnlm_forward.1} parent=0
    _
  %s8 = ssub.s32 1, %s6
  %s9 = scalar_select 0, %s8, %s6
  // Predicated region
  $region2: #{fnnlm_forward.1} parent=0 // pred_check
    _
  $region3: #{fnnlm_forward.1} parent=0 // pred_check_branch
    %11 = sbr.rel (0) target = $region5
  $region4: #{fnnlm_forward.1} parent=0 // pred_region
    _
  $region5: #{fnnlm_forward.1} parent=0 // pred_fallthru
    _
  // Predicated region
  $region6: #{fnnlm_forward.1} parent=0 // pred_check
    _
  $region7: #{fnnlm_forward.1} parent=0 // pred_check_branch
    %13 = sbr.rel (0) target = $region9
  $region8: #{fnnlm_forward.1} parent=0 // pred_region
    _
  $region9: #{fnnlm_forward.1} parent=0 // pred_fallthru
    _
  // Predicated region
  $region10: #{fnnlm_forward.1} parent=0 // pred_check
    _
  $region11: #{fnnlm_forward.1} parent=0 // pred_check_branch
    %15 = sbr.rel (0) target = $region13
  $region12: #{fnnlm_forward.1} parent=0 // pred_region
    _
  $region13: #{fnnlm_forward.1} parent=0 // pred_fallthru
    _
  // Predicated region
  $region14: #{fnnlm_forward.1} parent=0 // pred_check
    _
  $region15: #{fnnlm_forward.1} parent=0 // pred_check_branch
    %17 = sbr.rel (0) target = $region17
  $region16: #{fnnlm_forward.1} parent=0 // pred_region
    _
  $region17: #{fnnlm_forward.1} parent=0 // pred_fallthru
    _
  // Predicated region
  $region18: #{fnnlm_forward.1} parent=0 // pred_check
    _
  $region19: #{fnnlm_forward.1} parent=0 // pred_check_branch
    %19 = sbr.rel (0) target = $region21
  $region20: #{fnnlm_forward.1} parent=0 // pred_region
    _
  $region21: #{fnnlm_forward.1} parent=0 // pred_fallthru
    _
  %p21 = scmp.eq.s32.totalorder 0, 0
  // Predicated region
  $region22: #{fnnlm_forward.1} parent=0 // pred_check
    %p22 = pneg %p21
  $region23: #{fnnlm_forward.1} parent=0 // pred_check_branch
    %24 = sbr.rel (%p22) target = $region25
  $region24: #{fnnlm_forward.1} parent=0 // pred_region
    %v25 = vld [vmem:[%s0] sm:$0xf]
    %v26 = vld [vmem:[%s0 + $0x4] sm:$0xf]
    %v27 = vld [vmem:[%s0 + $0x8] sm:$0xf]
    %v28 = vld [vmem:[%s0 + $0xc] sm:$0xf]
    %v29 = vld [vmem:[%s0 + $0x10] sm:$0xf]
    %v30 = vld [vmem:[%s0 + $0x14] sm:$0xf]
    %v31 = vld [vmem:[%s0 + $0x18] sm:$0xf]
    %v32 = vld [vmem:[%s0 + $0x1c] sm:$0xf]
    %v33 = vld [vmem:[%s0 + $0x20] sm:$0xf]
    %v34 = vld [vmem:[%s0 + $0x24] sm:$0xf]
    %v35 = vld [vmem:[%s0 + $0x28] sm:$0xf]
    %v36 = vld [vmem:[%s0 + $0x2c] sm:$0xf]
    %v37 = vld [vmem:[%s0 + $0x30] sm:$0xf]
    %v38 = vld [vmem:[%s0 + $0x34] sm:$0xf]
    %v39 = vld [vmem:[%s0 + $0x38] sm:$0xf]
    %v40 = vld [vmem:[%s0 + $0x3c] sm:$0xf]
    %v41 = vld [vmem:[%s1] sm:$0xf]
    %v42 = vld [vmem:[%s1 + $0x4] sm:$0xf]
    %v43 = vld [vmem:[%s1 + $0x8] sm:$0xf]
    %v44 = vld [vmem:[%s1 + $0xc] sm:$0xf]
    %v45 = vld [vmem:[%s1 + $0x10] sm:$0xf]
    %v46 = vld [vmem:[%s1 + $0x14] sm:$0xf]
    %v47 = vld [vmem:[%s1 + $0x18] sm:$0xf]
    %v48 = vld [vmem:[%s1 + $0x1c] sm:$0xf]
    %v49 = vld [vmem:[%s2] sm:$0x1]
    %v51 = vperm.slane %v49, 0
    %v69 = vunpack.c.l.b16 %v25
    %v70 = vunpack.c.l.b16 %v26
    %v71 = vunpack.c.l.b16 %v27
    %v72 = vunpack.c.l.b16 %v28
    %v73 = vunpack.c.l.b16 %v29
    %v74 = vunpack.c.l.b16 %v30
    %v75 = vunpack.c.l.b16 %v31
    %v76 = vunpack.c.l.b16 %v32
    %v77 = vunpack.c.l.b16 %v33
    %v78 = vunpack.c.l.b16 %v34
    %v79 = vunpack.c.l.b16 %v35
    %v80 = vunpack.c.l.b16 %v36
    %v81 = vunpack.c.l.b16 %v37
    %v82 = vunpack.c.l.b16 %v38
    %v83 = vunpack.c.l.b16 %v39
    %v84 = vunpack.c.l.b16 %v40
    %v85 = vpack.c.b16 %v70, %v69
    %v86 = vpack.c.b16 %v72, %v71
    %v87 = vpack.c.b16 %v74, %v73
    %v88 = vpack.c.b16 %v76, %v75
    %v89 = vpack.c.b16 %v78, %v77
    %v90 = vpack.c.b16 %v80, %v79
    %v91 = vpack.c.b16 %v82, %v81
    %v92 = vpack.c.b16 %v84, %v83
    %v101 = vunpack.c.l.b16 %v41
    %v102 = vunpack.c.l.b16 %v42
    %v103 = vunpack.c.l.b16 %v43
    %v104 = vunpack.c.l.b16 %v44
    %v105 = vunpack.c.l.b16 %v45
    %v106 = vunpack.c.l.b16 %v46
    %v107 = vunpack.c.l.b16 %v47
    %v108 = vunpack.c.l.b16 %v48
    %v109 = vpack.c.b16 %v102, %v101
    %v110 = vpack.c.b16 %v104, %v103
    %v111 = vpack.c.b16 %v106, %v105
    %v112 = vpack.c.b16 %v108, %v107
    %vm117 = vcmask 523264
    %v119 = vsel %vm117, %v85, 0
    %v122 = vsel %vm117, %v86, 0
    %v125 = vsel %vm117, %v87, 0
    %v128 = vsel %vm117, %v88, 0
    %v131 = vsel %vm117, %v89, 0
    %v134 = vsel %vm117, %v90, 0
    %v137 = vsel %vm117, %v91, 0
    %v140 = vsel %vm117, %v92, 0
    %142 = vmatpush.bf16.msra.mxu0 0
    %143 = vmatpush.bf16.msra.mxu0 0
    %144 = vmatpush.bf16.msra.mxu0 0
    %145 = vmatpush.bf16.msra.mxu0 0
    %146 = vmatpush.bf16.msra.mxu0 %v112
    %147 = vmatpush.bf16.msra.mxu0 %v111
    %148 = vmatpush.bf16.msra.mxu0 %v110
    %149 = vmatpush.bf16.msra.mxu0 %v109
    %150 = vmatmul.bf16.gmra.mxu0 %v119
    %v151 = vpop.f32.mrf.mxu0
    %v152 = vadd.f32 %v51, %v151
    %v153 = vpop.f32.mrf.mxu0
    %v154 = vadd.f32 %v51, %v153
    %155 = vmatmul.bf16.gmra.mxu0 %v122
    %v156 = vpop.f32.mrf.mxu0
    %v157 = vadd.f32 %v51, %v156
    %v158 = vpop.f32.mrf.mxu0
    %v159 = vadd.f32 %v51, %v158
    %160 = vmatmul.bf16.gmra.mxu0 %v125
    %v161 = vpop.f32.mrf.mxu0
    %v162 = vadd.f32 %v51, %v161
    %v163 = vpop.f32.mrf.mxu0
    %v164 = vadd.f32 %v51, %v163
    %165 = vmatmul.bf16.gmra.mxu0 %v128
    %v166 = vpop.f32.mrf.mxu0
    %v167 = vadd.f32 %v51, %v166
    %v168 = vpop.f32.mrf.mxu0
    %v169 = vadd.f32 %v51, %v168
    %170 = vmatmul.bf16.gmra.mxu0 %v131
    %v171 = vpop.f32.mrf.mxu0
    %v172 = vadd.f32 %v51, %v171
    %v173 = vpop.f32.mrf.mxu0
    %v174 = vadd.f32 %v51, %v173
    %175 = vmatmul.bf16.gmra.mxu0 %v134
    %v176 = vpop.f32.mrf.mxu0
    %v177 = vadd.f32 %v51, %v176
    %v178 = vpop.f32.mrf.mxu0
    %v179 = vadd.f32 %v51, %v178
    %180 = vmatmul.bf16.gmra.mxu0 %v137
    %v181 = vpop.f32.mrf.mxu0
    %v182 = vadd.f32 %v51, %v181
    %v183 = vpop.f32.mrf.mxu0
    %v184 = vadd.f32 %v51, %v183
    %185 = vmatmul.bf16.gmra.mxu0 %v140
    %v186 = vpop.f32.mrf.mxu0
    %v187 = vadd.f32 %v51, %v186
    %v188 = vpop.f32.mrf.mxu0
    %v189 = vadd.f32 %v51, %v188
    %190 = vdwg.mxu0
    %v191 = vtanh.pop %v152
    %v192 = vtanh.pop %v154
    %v193 = vtanh.pop %v157
    %v194 = vtanh.pop %v159
    %v195 = vtanh.pop %v162
    %v196 = vtanh.pop %v164
    %v197 = vtanh.pop %v167
    %v198 = vtanh.pop %v169
    %v199 = vtanh.pop %v172
    %v200 = vtanh.pop %v174
    %v201 = vtanh.pop %v177
    %v202 = vtanh.pop %v179
    %v203 = vtanh.pop %v182
    %v204 = vtanh.pop %v184
    %v205 = vtanh.pop %v187
    %v206 = vtanh.pop %v189
    %v207 = vpack.c.bf16 %v191, %v191
    %v208 = vpack.c.bf16 %v192, %v192
    %v209 = vpack.c.bf16 %v193, %v193
    %v210 = vpack.c.bf16 %v194, %v194
    %v211 = vpack.c.bf16 %v195, %v195
    %v212 = vpack.c.bf16 %v196, %v196
    %v213 = vpack.c.bf16 %v197, %v197
    %v214 = vpack.c.bf16 %v198, %v198
    %v215 = vpack.c.bf16 %v199, %v199
    %v216 = vpack.c.bf16 %v200, %v200
    %v217 = vpack.c.bf16 %v201, %v201
    %v218 = vpack.c.bf16 %v202, %v202
    %v219 = vpack.c.bf16 %v203, %v203
    %v220 = vpack.c.bf16 %v204, %v204
    %v221 = vpack.c.bf16 %v205, %v205
    %v222 = vpack.c.bf16 %v206, %v206
    %223 = vst [vmem:[#allocation2] sm:$0xf] %v207
    %224 = vst [vmem:[#allocation2 + $0x4] sm:$0xf] %v208
    %225 = vst [vmem:[#allocation2 + $0x8] sm:$0xf] %v209
    %226 = vst [vmem:[#allocation2 + $0xc] sm:$0xf] %v210
    %227 = vst [vmem:[#allocation2 + $0x10] sm:$0xf] %v211
    %228 = vst [vmem:[#allocation2 + $0x14] sm:$0xf] %v212
    %229 = vst [vmem:[#allocation2 + $0x18] sm:$0xf] %v213
    %230 = vst [vmem:[#allocation2 + $0x1c] sm:$0xf] %v214
    %231 = vst [vmem:[#allocation2 + $0x20] sm:$0xf] %v215
    %232 = vst [vmem:[#allocation2 + $0x24] sm:$0xf] %v216
    %233 = vst [vmem:[#allocation2 + $0x28] sm:$0xf] %v217
    %234 = vst [vmem:[#allocation2 + $0x2c] sm:$0xf] %v218
    %235 = vst [vmem:[#allocation2 + $0x30] sm:$0xf] %v219
    %236 = vst [vmem:[#allocation2 + $0x34] sm:$0xf] %v220
    %237 = vst [vmem:[#allocation2 + $0x38] sm:$0xf] %v221
    %238 = vst [vmem:[#allocation2 + $0x3c] sm:$0xf] %v222
    %vm239 = vcmask 7168
    %240 = vst.msk [vmem:[#allocation3] sm:$0xff] %vm239, -inf
    %241 = vst.msk [vmem:[#allocation3 + $0x8] sm:$0xff] %vm239, -inf
    %242 = vst.msk [vmem:[#allocation3 + $0x10] sm:$0xff] %vm239, -inf
    %243 = vst.msk [vmem:[#allocation3 + $0x18] sm:$0xff] %vm239, -inf
    %244 = vst.msk [vmem:[#allocation3 + $0x20] sm:$0xff] %vm239, -inf
    %245 = vst.msk [vmem:[#allocation3 + $0x28] sm:$0xff] %vm239, -inf
    %246 = vst.msk [vmem:[#allocation3 + $0x30] sm:$0xff] %vm239, -inf
    %247 = vst.msk [vmem:[#allocation3 + $0x38] sm:$0xff] %vm239, -inf
    %248 = vst.msk [vmem:[#allocation3 + $0x40] sm:$0xff] %vm239, -inf
    %249 = vst.msk [vmem:[#allocation3 + $0x48] sm:$0xff] %vm239, -inf
    %250 = vst.msk [vmem:[#allocation3 + $0x50] sm:$0xff] %vm239, -inf
    %251 = vst.msk [vmem:[#allocation3 + $0x58] sm:$0xff] %vm239, -inf
    %252 = vst.msk [vmem:[#allocation3 + $0x60] sm:$0xff] %vm239, -inf
    %253 = vst.msk [vmem:[#allocation3 + $0x68] sm:$0xff] %vm239, -inf
    %254 = vst.msk [vmem:[#allocation3 + $0x70] sm:$0xff] %vm239, -inf
    %255 = vst.msk [vmem:[#allocation3 + $0x78] sm:$0xff] %vm239, -inf
    %256 = vst.msk [vmem:[#allocation4] sm:$0xff] %vm239, 0.0
    %257 = vst.msk [vmem:[#allocation4 + $0x8] sm:$0xff] %vm239, 0.0
    %258 = vst.msk [vmem:[#allocation4 + $0x10] sm:$0xff] %vm239, 0.0
    %259 = vst.msk [vmem:[#allocation4 + $0x18] sm:$0xff] %vm239, 0.0
    %260 = vst.msk [vmem:[#allocation4 + $0x20] sm:$0xff] %vm239, 0.0
    %261 = vst.msk [vmem:[#allocation4 + $0x28] sm:$0xff] %vm239, 0.0
    %262 = vst.msk [vmem:[#allocation4 + $0x30] sm:$0xff] %vm239, 0.0
    %263 = vst.msk [vmem:[#allocation4 + $0x38] sm:$0xff] %vm239, 0.0
    %264 = vst.msk [vmem:[#allocation4 + $0x40] sm:$0xff] %vm239, 0.0
    %265 = vst.msk [vmem:[#allocation4 + $0x48] sm:$0xff] %vm239, 0.0
    %266 = vst.msk [vmem:[#allocation4 + $0x50] sm:$0xff] %vm239, 0.0
    %267 = vst.msk [vmem:[#allocation4 + $0x58] sm:$0xff] %vm239, 0.0
    %268 = vst.msk [vmem:[#allocation4 + $0x60] sm:$0xff] %vm239, 0.0
    %269 = vst.msk [vmem:[#allocation4 + $0x68] sm:$0xff] %vm239, 0.0
    %270 = vst.msk [vmem:[#allocation4 + $0x70] sm:$0xff] %vm239, 0.0
    %271 = vst.msk [vmem:[#allocation4 + $0x78] sm:$0xff] %vm239, 0.0
  $region25: #{fnnlm_forward.1} parent=0 // pred_fallthru
    _
  %v272 = vld [vmem:[#allocation2] sm:$0xf]
  %v273 = vld [vmem:[#allocation2 + $0x4] sm:$0xf]
  %v274 = vld [vmem:[#allocation2 + $0x8] sm:$0xf]
  %v275 = vld [vmem:[#allocation2 + $0xc] sm:$0xf]
  %v276 = vld [vmem:[#allocation2 + $0x10] sm:$0xf]
  %v277 = vld [vmem:[#allocation2 + $0x14] sm:$0xf]
  %v278 = vld [vmem:[#allocation2 + $0x18] sm:$0xf]
  %v279 = vld [vmem:[#allocation2 + $0x1c] sm:$0xf]
  %v280 = vld [vmem:[#allocation2 + $0x20] sm:$0xf]
  %v281 = vld [vmem:[#allocation2 + $0x24] sm:$0xf]
  %v282 = vld [vmem:[#allocation2 + $0x28] sm:$0xf]
  %v283 = vld [vmem:[#allocation2 + $0x2c] sm:$0xf]
  %v284 = vld [vmem:[#allocation2 + $0x30] sm:$0xf]
  %v285 = vld [vmem:[#allocation2 + $0x34] sm:$0xf]
  %v286 = vld [vmem:[#allocation2 + $0x38] sm:$0xf]
  %v287 = vld [vmem:[#allocation2 + $0x3c] sm:$0xf]
  %v288 = vld [vmem:[%s3] sm:$0xff]
  %v289 = vld [vmem:[%s3 + $0x8] sm:$0xff]
  %v290 = vld [vmem:[%s3 + $0x10] sm:$0xff]
  %v291 = vld [vmem:[%s3 + $0x18] sm:$0xff]
  %v292 = vld [vmem:[%s3 + $0x20] sm:$0xff]
  %v293 = vld [vmem:[%s3 + $0x28] sm:$0xff]
  %v294 = vld [vmem:[%s3 + $0x30] sm:$0xff]
  %v295 = vld [vmem:[%s3 + $0x38] sm:$0xff]
  %v296 = vld [vmem:[%s3 + $0x40] sm:$0xff]
  %v297 = vld [vmem:[%s3 + $0x48] sm:$0xff]
  %v298 = vld [vmem:[%s3 + $0x50] sm:$0xff]
  %v299 = vld [vmem:[%s3 + $0x58] sm:$0xff]
  %v300 = vld [vmem:[%s3 + $0x60] sm:$0xff]
  %v301 = vld [vmem:[%s3 + $0x68] sm:$0xff]
  %v302 = vld [vmem:[%s3 + $0x70] sm:$0xff]
  %v303 = vld [vmem:[%s3 + $0x78] sm:$0xff]
  %v304 = vld [vmem:[%s4] sm:$0x3]
  %v306 = vperm.slane %v304, 0
  %v307 = vperm.slane %v304, 1
  %v326 = vunpack.c.l.b16 %v272
  %v327 = vunpack.c.l.b16 %v273
  %v328 = vunpack.c.l.b16 %v274
  %v329 = vunpack.c.l.b16 %v275
  %v330 = vunpack.c.l.b16 %v276
  %v331 = vunpack.c.l.b16 %v277
  %v332 = vunpack.c.l.b16 %v278
  %v333 = vunpack.c.l.b16 %v279
  %v334 = vunpack.c.l.b16 %v280
  %v335 = vunpack.c.l.b16 %v281
  %v336 = vunpack.c.l.b16 %v282
  %v337 = vunpack.c.l.b16 %v283
  %v338 = vunpack.c.l.b16 %v284
  %v339 = vunpack.c.l.b16 %v285
  %v340 = vunpack.c.l.b16 %v286
  %v341 = vunpack.c.l.b16 %v287
  %v342 = vpack.c.b16 %v327, %v326
  %v343 = vpack.c.b16 %v329, %v328
  %v344 = vpack.c.b16 %v331, %v330
  %v345 = vpack.c.b16 %v333, %v332
  %v346 = vpack.c.b16 %v335, %v334
  %v347 = vpack.c.b16 %v337, %v336
  %v348 = vpack.c.b16 %v339, %v338
  %v349 = vpack.c.b16 %v341, %v340
  %v374 = vunpack.c.l.b16 %v288
  %v375 = vunpack.c.h.b16 %v288
  %v376 = vunpack.c.l.b16 %v289
  %v377 = vunpack.c.h.b16 %v289
  %v378 = vunpack.c.l.b16 %v290
  %v379 = vunpack.c.h.b16 %v290
  %v380 = vunpack.c.l.b16 %v291
  %v381 = vunpack.c.h.b16 %v291
  %v382 = vunpack.c.l.b16 %v292
  %v383 = vunpack.c.h.b16 %v292
  %v384 = vunpack.c.l.b16 %v293
  %v385 = vunpack.c.h.b16 %v293
  %v386 = vunpack.c.l.b16 %v294
  %v387 = vunpack.c.h.b16 %v294
  %v388 = vunpack.c.l.b16 %v295
  %v389 = vunpack.c.h.b16 %v295
  %v390 = vunpack.c.l.b16 %v296
  %v391 = vunpack.c.h.b16 %v296
  %v392 = vunpack.c.l.b16 %v297
  %v393 = vunpack.c.h.b16 %v297
  %v394 = vunpack.c.l.b16 %v298
  %v395 = vunpack.c.h.b16 %v298
  %v396 = vunpack.c.l.b16 %v299
  %v397 = vunpack.c.h.b16 %v299
  %v398 = vunpack.c.l.b16 %v300
  %v399 = vunpack.c.h.b16 %v300
  %v400 = vunpack.c.l.b16 %v301
  %v401 = vunpack.c.h.b16 %v301
  %v402 = vunpack.c.l.b16 %v302
  %v403 = vunpack.c.h.b16 %v302
  %v404 = vunpack.c.l.b16 %v303
  %v405 = vunpack.c.h.b16 %v303
  %v406 = vpack.c.b16 %v376, %v374
  %v407 = vpack.c.b16 %v377, %v375
  %v408 = vpack.c.b16 %v380, %v378
  %v409 = vpack.c.b16 %v381, %v379
  %v410 = vpack.c.b16 %v384, %v382
  %v411 = vpack.c.b16 %v385, %v383
  %v412 = vpack.c.b16 %v388, %v386
  %v413 = vpack.c.b16 %v389, %v387
  %v414 = vpack.c.b16 %v392, %v390
  %v415 = vpack.c.b16 %v393, %v391
  %v416 = vpack.c.b16 %v396, %v394
  %v417 = vpack.c.b16 %v397, %v395
  %v418 = vpack.c.b16 %v400, %v398
  %v419 = vpack.c.b16 %v401, %v399
  %v420 = vpack.c.b16 %v404, %v402
  %v421 = vpack.c.b16 %v405, %v403
  %438 = vmatpush.bf16.msra.mxu0 %v420
  %439 = vmatpush.bf16.msra.mxu0 %v418
  %440 = vmatpush.bf16.msra.mxu0 %v416
  %441 = vmatpush.bf16.msra.mxu0 %v414
  %442 = vmatpush.bf16.msra.mxu0 %v412
  %443 = vmatpush.bf16.msra.mxu0 %v410
  %444 = vmatpush.bf16.msra.mxu0 %v408
  %445 = vmatpush.bf16.msra.mxu0 %v406
  %446 = vmatmul.bf16.gmra.mxu0 %v342
  %v447 = vpop.f32.mrf.mxu0
  %v448 = vadd.f32 %v306, %v447
  %v449 = vpop.f32.mrf.mxu0
  %v450 = vadd.f32 %v306, %v449
  %451 = vmatmul.bf16.gmra.mxu0 %v343
  %v452 = vpop.f32.mrf.mxu0
  %v453 = vadd.f32 %v306, %v452
  %v454 = vpop.f32.mrf.mxu0
  %v455 = vadd.f32 %v306, %v454
  %456 = vmatmul.bf16.gmra.mxu0 %v344
  %v457 = vpop.f32.mrf.mxu0
  %v458 = vadd.f32 %v306, %v457
  %v459 = vpop.f32.mrf.mxu0
  %v460 = vadd.f32 %v306, %v459
  %461 = vmatmul.bf16.gmra.mxu0 %v345
  %v462 = vpop.f32.mrf.mxu0
  %v463 = vadd.f32 %v306, %v462
  %v464 = vpop.f32.mrf.mxu0
  %v465 = vadd.f32 %v306, %v464
  %466 = vmatmul.bf16.gmra.mxu0 %v346
  %v467 = vpop.f32.mrf.mxu0
  %v468 = vadd.f32 %v306, %v467
  %v469 = vpop.f32.mrf.mxu0
  %v470 = vadd.f32 %v306, %v469
  %471 = vmatmul.bf16.gmra.mxu0 %v347
  %v472 = vpop.f32.mrf.mxu0
  %v473 = vadd.f32 %v306, %v472
  %v474 = vpop.f32.mrf.mxu0
  %v475 = vadd.f32 %v306, %v474
  %476 = vmatmul.bf16.gmra.mxu0 %v348
  %v477 = vpop.f32.mrf.mxu0
  %v478 = vadd.f32 %v306, %v477
  %v479 = vpop.f32.mrf.mxu0
  %v480 = vadd.f32 %v306, %v479
  %481 = vmatmul.bf16.gmra.mxu0 %v349
  %v482 = vpop.f32.mrf.mxu0
  %v483 = vadd.f32 %v306, %v482
  %v484 = vpop.f32.mrf.mxu0
  %v485 = vadd.f32 %v306, %v484
  %486 = vdwg.mxu0
  %487 = vmatpush.bf16.msra.mxu0 %v421
  %488 = vmatpush.bf16.msra.mxu0 %v419
  %489 = vmatpush.bf16.msra.mxu0 %v417
  %490 = vmatpush.bf16.msra.mxu0 %v415
  %491 = vmatpush.bf16.msra.mxu0 %v413
  %492 = vmatpush.bf16.msra.mxu0 %v411
  %493 = vmatpush.bf16.msra.mxu0 %v409
  %494 = vmatpush.bf16.msra.mxu0 %v407
  %495 = vmatmul.bf16.gmra.mxu0 %v342
  %v496 = vpop.f32.mrf.mxu0
  %v497 = vadd.f32 %v307, %v496
  %v498 = vpop.f32.mrf.mxu0
  %v499 = vadd.f32 %v307, %v498
  %500 = vmatmul.bf16.gmra.mxu0 %v343
  %v501 = vpop.f32.mrf.mxu0
  %v502 = vadd.f32 %v307, %v501
  %v503 = vpop.f32.mrf.mxu0
  %v504 = vadd.f32 %v307, %v503
  %505 = vmatmul.bf16.gmra.mxu0 %v344
  %v506 = vpop.f32.mrf.mxu0
  %v507 = vadd.f32 %v307, %v506
  %v508 = vpop.f32.mrf.mxu0
  %v509 = vadd.f32 %v307, %v508
  %510 = vmatmul.bf16.gmra.mxu0 %v345
  %v511 = vpop.f32.mrf.mxu0
  %v512 = vadd.f32 %v307, %v511
  %v513 = vpop.f32.mrf.mxu0
  %v514 = vadd.f32 %v307, %v513
  %515 = vmatmul.bf16.gmra.mxu0 %v346
  %v516 = vpop.f32.mrf.mxu0
  %v517 = vadd.f32 %v307, %v516
  %v518 = vpop.f32.mrf.mxu0
  %v519 = vadd.f32 %v307, %v518
  %520 = vmatmul.bf16.gmra.mxu0 %v347
  %v521 = vpop.f32.mrf.mxu0
  %v522 = vadd.f32 %v307, %v521
  %v523 = vpop.f32.mrf.mxu0
  %v524 = vadd.f32 %v307, %v523
  %525 = vmatmul.bf16.gmra.mxu0 %v348
  %v526 = vpop.f32.mrf.mxu0
  %v527 = vadd.f32 %v307, %v526
  %v528 = vpop.f32.mrf.mxu0
  %v529 = vadd.f32 %v307, %v528
  %530 = vmatmul.bf16.gmra.mxu0 %v349
  %v531 = vpop.f32.mrf.mxu0
  %v532 = vadd.f32 %v307, %v531
  %v533 = vpop.f32.mrf.mxu0
  %v534 = vadd.f32 %v307, %v533
  %535 = vdwg.mxu0
  %s536 = smul.u32 0, 256
  %s537 = sshra.s32 %s536, 7
  %s538 = sand.u32 %s536, 127
  %s539 = smul.addr %s537, 8
  %s540 = scalar_lea.vmem %s5, %s539
  %541 = vst [vmem:[%s540] sm:$0xff] %v448
  %542 = vst [vmem:[%s540 + $0x8] sm:$0xff] %v497
  %543 = vst [vmem:[%s540 + $0x10] sm:$0xff] %v450
  %544 = vst [vmem:[%s540 + $0x18] sm:$0xff] %v499
  %545 = vst [vmem:[%s540 + $0x20] sm:$0xff] %v453
  %546 = vst [vmem:[%s540 + $0x28] sm:$0xff] %v502
  %547 = vst [vmem:[%s540 + $0x30] sm:$0xff] %v455
  %548 = vst [vmem:[%s540 + $0x38] sm:$0xff] %v504
  %549 = vst [vmem:[%s540 + $0x40] sm:$0xff] %v458
  %550 = vst [vmem:[%s540 + $0x48] sm:$0xff] %v507
  %551 = vst [vmem:[%s540 + $0x50] sm:$0xff] %v460
  %552 = vst [vmem:[%s540 + $0x58] sm:$0xff] %v509
  %553 = vst [vmem:[%s540 + $0x60] sm:$0xff] %v463
  %554 = vst [vmem:[%s540 + $0x68] sm:$0xff] %v512
  %555 = vst [vmem:[%s540 + $0x70] sm:$0xff] %v465
  %556 = vst [vmem:[%s540 + $0x78] sm:$0xff] %v514
  %557 = vst [vmem:[%s540 + $0x80] sm:$0xff] %v468
  %558 = vst [vmem:[%s540 + $0x88] sm:$0xff] %v517
  %559 = vst [vmem:[%s540 + $0x90] sm:$0xff] %v470
  %560 = vst [vmem:[%s540 + $0x98] sm:$0xff] %v519
  %561 = vst [vmem:[%s540 + $0xa0] sm:$0xff] %v473
  %562 = vst [vmem:[%s540 + $0xa8] sm:$0xff] %v522
  %563 = vst [vmem:[%s540 + $0xb0] sm:$0xff] %v475
  %564 = vst [vmem:[%s540 + $0xb8] sm:$0xff] %v524
  %565 = vst [vmem:[%s540 + $0xc0] sm:$0xff] %v478
  %566 = vst [vmem:[%s540 + $0xc8] sm:$0xff] %v527
  %567 = vst [vmem:[%s540 + $0xd0] sm:$0xff] %v480
  %568 = vst [vmem:[%s540 + $0xd8] sm:$0xff] %v529
  %569 = vst [vmem:[%s540 + $0xe0] sm:$0xff] %v483
  %570 = vst [vmem:[%s540 + $0xe8] sm:$0xff] %v532
  %571 = vst [vmem:[%s540 + $0xf0] sm:$0xff] %v485
  %572 = vst [vmem:[%s540 + $0xf8] sm:$0xff] %v534
  %v573 = vld [vmem:[#allocation3] sm:$0xff]
  %v574 = vld [vmem:[#allocation3 + $0x8] sm:$0xff]
  %v575 = vld [vmem:[#allocation3 + $0x10] sm:$0xff]
  %v576 = vld [vmem:[#allocation3 + $0x18] sm:$0xff]
  %v577 = vld [vmem:[#allocation3 + $0x20] sm:$0xff]
  %v578 = vld [vmem:[#allocation3 + $0x28] sm:$0xff]
  %v579 = vld [vmem:[#allocation3 + $0x30] sm:$0xff]
  %v580 = vld [vmem:[#allocation3 + $0x38] sm:$0xff]
  %v581 = vld [vmem:[#allocation3 + $0x40] sm:$0xff]
  %v582 = vld [vmem:[#allocation3 + $0x48] sm:$0xff]
  %v583 = vld [vmem:[#allocation3 + $0x50] sm:$0xff]
  %v584 = vld [vmem:[#allocation3 + $0x58] sm:$0xff]
  %v585 = vld [vmem:[#allocation3 + $0x60] sm:$0xff]
  %v586 = vld [vmem:[#allocation3 + $0x68] sm:$0xff]
  %v587 = vld [vmem:[#allocation3 + $0x70] sm:$0xff]
  %v588 = vld [vmem:[#allocation3 + $0x78] sm:$0xff]
  %v589 = vmax.f32 %v448, %v497
  %590 = vmax.xlane.f32.xlu0 %v589
  %v591 = vpop.xlane.xlu0 %590
  %v592 = vmax.f32 %v450, %v499
  %593 = vmax.xlane.f32.xlu0 %v592
  %v594 = vpop.xlane.xlu0 %593
  %v595 = vmax.f32 %v453, %v502
  %596 = vmax.xlane.f32.xlu0 %v595
  %v597 = vpop.xlane.xlu0 %596
  %v598 = vmax.f32 %v455, %v504
  %599 = vmax.xlane.f32.xlu0 %v598
  %v600 = vpop.xlane.xlu0 %599
  %v601 = vmax.f32 %v458, %v507
  %602 = vmax.xlane.f32.xlu0 %v601
  %v603 = vpop.xlane.xlu0 %602
  %v604 = vmax.f32 %v460, %v509
  %605 = vmax.xlane.f32.xlu0 %v604
  %v606 = vpop.xlane.xlu0 %605
  %v607 = vmax.f32 %v463, %v512
  %608 = vmax.xlane.f32.xlu0 %v607
  %v609 = vpop.xlane.xlu0 %608
  %v610 = vmax.f32 %v465, %v514
  %611 = vmax.xlane.f32.xlu0 %v610
  %v612 = vpop.xlane.xlu0 %611
  %v613 = vmax.f32 %v468, %v517
  %614 = vmax.xlane.f32.xlu0 %v613
  %v615 = vpop.xlane.xlu0 %614
  %v616 = vmax.f32 %v470, %v519
  %617 = vmax.xlane.f32.xlu0 %v616
  %v618 = vpop.xlane.xlu0 %617
  %v619 = vmax.f32 %v473, %v522
  %620 = vmax.xlane.f32.xlu0 %v619
  %v621 = vpop.xlane.xlu0 %620
  %v622 = vmax.f32 %v475, %v524
  %623 = vmax.xlane.f32.xlu0 %v622
  %v624 = vpop.xlane.xlu0 %623
  %v625 = vmax.f32 %v478, %v527
  %626 = vmax.xlane.f32.xlu0 %v625
  %v627 = vpop.xlane.xlu0 %626
  %v628 = vmax.f32 %v480, %v529
  %629 = vmax.xlane.f32.xlu0 %v628
  %v630 = vpop.xlane.xlu0 %629
  %v631 = vmax.f32 %v483, %v532
  %632 = vmax.xlane.f32.xlu0 %v631
  %v633 = vpop.xlane.xlu0 %632
  %v634 = vmax.f32 %v485, %v534
  %635 = vmax.xlane.f32.xlu0 %v634
  %v636 = vpop.xlane.xlu0 %635
  %v637 = vmax.f32 %v573, %v591
  %v638 = vmax.f32 %v574, %v594
  %v639 = vmax.f32 %v575, %v597
  %v640 = vmax.f32 %v576, %v600
  %v641 = vmax.f32 %v577, %v603
  %v642 = vmax.f32 %v578, %v606
  %v643 = vmax.f32 %v579, %v609
  %v644 = vmax.f32 %v580, %v612
  %v645 = vmax.f32 %v581, %v615
  %v646 = vmax.f32 %v582, %v618
  %v647 = vmax.f32 %v583, %v621
  %v648 = vmax.f32 %v584, %v624
  %v649 = vmax.f32 %v585, %v627
  %v650 = vmax.f32 %v586, %v630
  %v651 = vmax.f32 %v587, %v633
  %v652 = vmax.f32 %v588, %v636
  %v653 = vld [vmem:[#allocation4] sm:$0xff]
  %v654 = vld [vmem:[#allocation4 + $0x8] sm:$0xff]
  %v655 = vld [vmem:[#allocation4 + $0x10] sm:$0xff]
  %v656 = vld [vmem:[#allocation4 + $0x18] sm:$0xff]
  %v657 = vld [vmem:[#allocation4 + $0x20] sm:$0xff]
  %v658 = vld [vmem:[#allocation4 + $0x28] sm:$0xff]
  %v659 = vld [vmem:[#allocation4 + $0x30] sm:$0xff]
  %v660 = vld [vmem:[#allocation4 + $0x38] sm:$0xff]
  %v661 = vld [vmem:[#allocation4 + $0x40] sm:$0xff]
  %v662 = vld [vmem:[#allocation4 + $0x48] sm:$0xff]
  %v663 = vld [vmem:[#allocation4 + $0x50] sm:$0xff]
  %v664 = vld [vmem:[#allocation4 + $0x58] sm:$0xff]
  %v665 = vld [vmem:[#allocation4 + $0x60] sm:$0xff]
  %v666 = vld [vmem:[#allocation4 + $0x68] sm:$0xff]
  %v667 = vld [vmem:[#allocation4 + $0x70] sm:$0xff]
  %v668 = vld [vmem:[#allocation4 + $0x78] sm:$0xff]
  %v669 = vsub.f32 %v573, %v637
  %v670 = vsub.f32 %v574, %v638
  %v671 = vsub.f32 %v575, %v639
  %v672 = vsub.f32 %v576, %v640
  %v673 = vsub.f32 %v577, %v641
  %v674 = vsub.f32 %v578, %v642
  %v675 = vsub.f32 %v579, %v643
  %v676 = vsub.f32 %v580, %v644
  %v677 = vsub.f32 %v581, %v645
  %v678 = vsub.f32 %v582, %v646
  %v679 = vsub.f32 %v583, %v647
  %v680 = vsub.f32 %v584, %v648
  %v681 = vsub.f32 %v585, %v649
  %v682 = vsub.f32 %v586, %v650
  %v683 = vsub.f32 %v587, %v651
  %v684 = vsub.f32 %v588, %v652
  %v685 = vmul.f32 %v669, 1.442695
  %v686 = vpow.pop %v685
  %v687 = vmul.f32 %v670, 1.442695
  %v688 = vpow.pop %v687
  %v689 = vmul.f32 %v671, 1.442695
  %v690 = vpow.pop %v689
  %v691 = vmul.f32 %v672, 1.442695
  %v692 = vpow.pop %v691
  %v693 = vmul.f32 %v673, 1.442695
  %v694 = vpow.pop %v693
  %v695 = vmul.f32 %v674, 1.442695
  %v696 = vpow.pop %v695
  %v697 = vmul.f32 %v675, 1.442695
  %v698 = vpow.pop %v697
  %v699 = vmul.f32 %v676, 1.442695
  %v700 = vpow.pop %v699
  %v701 = vmul.f32 %v677, 1.442695
  %v702 = vpow.pop %v701
  %v703 = vmul.f32 %v678, 1.442695
  %v704 = vpow.pop %v703
  %v705 = vmul.f32 %v679, 1.442695
  %v706 = vpow.pop %v705
  %v707 = vmul.f32 %v680, 1.442695
  %v708 = vpow.pop %v707
  %v709 = vmul.f32 %v681, 1.442695
  %v710 = vpow.pop %v709
  %v711 = vmul.f32 %v682, 1.442695
  %v712 = vpow.pop %v711
  %v713 = vmul.f32 %v683, 1.442695
  %v714 = vpow.pop %v713
  %v715 = vmul.f32 %v684, 1.442695
  %v716 = vpow.pop %v715
  %v717 = vmul.f32 %v653, %v686
  %v718 = vmul.f32 %v654, %v688
  %v719 = vmul.f32 %v655, %v690
  %v720 = vmul.f32 %v656, %v692
  %v721 = vmul.f32 %v657, %v694
  %v722 = vmul.f32 %v658, %v696
  %v723 = vmul.f32 %v659, %v698
  %v724 = vmul.f32 %v660, %v700
  %v725 = vmul.f32 %v661, %v702
  %v726 = vmul.f32 %v662, %v704
  %v727 = vmul.f32 %v663, %v706
  %v728 = vmul.f32 %v664, %v708
  %v729 = vmul.f32 %v665, %v710
  %v730 = vmul.f32 %v666, %v712
  %v731 = vmul.f32 %v667, %v714
  %v732 = vmul.f32 %v668, %v716
  %734 = vset.pattern.permute.xlu0 0
  %735 = vperm.xlu0 %734, %v637
  %v736 = vpop.permute.xlu0 %735
  %739 = vset.pattern.permute.xlu0 0
  %740 = vperm.xlu0 %739, %v638
  %v741 = vpop.permute.xlu0 %740
  %744 = vset.pattern.permute.xlu0 0
  %745 = vperm.xlu0 %744, %v639
  %v746 = vpop.permute.xlu0 %745
  %749 = vset.pattern.permute.xlu0 0
  %750 = vperm.xlu0 %749, %v640
  %v751 = vpop.permute.xlu0 %750
  %754 = vset.pattern.permute.xlu0 0
  %755 = vperm.xlu0 %754, %v641
  %v756 = vpop.permute.xlu0 %755
  %759 = vset.pattern.permute.xlu0 0
  %760 = vperm.xlu0 %759, %v642
  %v761 = vpop.permute.xlu0 %760
  %764 = vset.pattern.permute.xlu0 0
  %765 = vperm.xlu0 %764, %v643
  %v766 = vpop.permute.xlu0 %765
  %769 = vset.pattern.permute.xlu0 0
  %770 = vperm.xlu0 %769, %v644
  %v771 = vpop.permute.xlu0 %770
  %774 = vset.pattern.permute.xlu0 0
  %775 = vperm.xlu0 %774, %v645
  %v776 = vpop.permute.xlu0 %775
  %779 = vset.pattern.permute.xlu0 0
  %780 = vperm.xlu0 %779, %v646
  %v781 = vpop.permute.xlu0 %780
  %784 = vset.pattern.permute.xlu0 0
  %785 = vperm.xlu0 %784, %v647
  %v786 = vpop.permute.xlu0 %785
  %789 = vset.pattern.permute.xlu0 0
  %790 = vperm.xlu0 %789, %v648
  %v791 = vpop.permute.xlu0 %790
  %794 = vset.pattern.permute.xlu0 0
  %795 = vperm.xlu0 %794, %v649
  %v796 = vpop.permute.xlu0 %795
  %799 = vset.pattern.permute.xlu0 0
  %800 = vperm.xlu0 %799, %v650
  %v801 = vpop.permute.xlu0 %800
  %804 = vset.pattern.permute.xlu0 0
  %805 = vperm.xlu0 %804, %v651
  %v806 = vpop.permute.xlu0 %805
  %809 = vset.pattern.permute.xlu0 0
  %810 = vperm.xlu0 %809, %v652
  %v811 = vpop.permute.xlu0 %810
  %v813 = vsub.f32 %v448, %v736
  %v814 = vsub.f32 %v497, %v736
  %v815 = vsub.f32 %v450, %v741
  %v816 = vsub.f32 %v499, %v741
  %v817 = vsub.f32 %v453, %v746
  %v818 = vsub.f32 %v502, %v746
  %v819 = vsub.f32 %v455, %v751
  %v820 = vsub.f32 %v504, %v751
  %v821 = vsub.f32 %v458, %v756
  %v822 = vsub.f32 %v507, %v756
  %v823 = vsub.f32 %v460, %v761
  %v824 = vsub.f32 %v509, %v761
  %v825 = vsub.f32 %v463, %v766
  %v826 = vsub.f32 %v512, %v766
  %v827 = vsub.f32 %v465, %v771
  %v828 = vsub.f32 %v514, %v771
  %v829 = vsub.f32 %v468, %v776
  %v830 = vsub.f32 %v517, %v776
  %v831 = vsub.f32 %v470, %v781
  %v832 = vsub.f32 %v519, %v781
  %v833 = vsub.f32 %v473, %v786
  %v834 = vsub.f32 %v522, %v786
  %v835 = vsub.f32 %v475, %v791
  %v836 = vsub.f32 %v524, %v791
  %v837 = vsub.f32 %v478, %v796
  %v838 = vsub.f32 %v527, %v796
  %v839 = vsub.f32 %v480, %v801
  %v840 = vsub.f32 %v529, %v801
  %v841 = vsub.f32 %v483, %v806
  %v842 = vsub.f32 %v532, %v806
  %v843 = vsub.f32 %v485, %v811
  %v844 = vsub.f32 %v534, %v811
  %v845 = vmul.f32 %v813, 1.442695
  %v846 = vpow.pop %v845
  %v847 = vmul.f32 %v814, 1.442695
  %v848 = vpow.pop %v847
  %v849 = vmul.f32 %v815, 1.442695
  %v850 = vpow.pop %v849
  %v851 = vmul.f32 %v816, 1.442695
  %v852 = vpow.pop %v851
  %v853 = vmul.f32 %v817, 1.442695
  %v854 = vpow.pop %v853
  %v855 = vmul.f32 %v818, 1.442695
  %v856 = vpow.pop %v855
  %v857 = vmul.f32 %v819, 1.442695
  %v858 = vpow.pop %v857
  %v859 = vmul.f32 %v820, 1.442695
  %v860 = vpow.pop %v859
  %v861 = vmul.f32 %v821, 1.442695
  %v862 = vpow.pop %v861
  %v863 = vmul.f32 %v822, 1.442695
  %v864 = vpow.pop %v863
  %v865 = vmul.f32 %v823, 1.442695
  %v866 = vpow.pop %v865
  %v867 = vmul.f32 %v824, 1.442695
  %v868 = vpow.pop %v867
  %v869 = vmul.f32 %v825, 1.442695
  %v870 = vpow.pop %v869
  %v871 = vmul.f32 %v826, 1.442695
  %v872 = vpow.pop %v871
  %v873 = vmul.f32 %v827, 1.442695
  %v874 = vpow.pop %v873
  %v875 = vmul.f32 %v828, 1.442695
  %v876 = vpow.pop %v875
  %v877 = vmul.f32 %v829, 1.442695
  %v878 = vpow.pop %v877
  %v879 = vmul.f32 %v830, 1.442695
  %v880 = vpow.pop %v879
  %v881 = vmul.f32 %v831, 1.442695
  %v882 = vpow.pop %v881
  %v883 = vmul.f32 %v832, 1.442695
  %v884 = vpow.pop %v883
  %v885 = vmul.f32 %v833, 1.442695
  %v886 = vpow.pop %v885
  %v887 = vmul.f32 %v834, 1.442695
  %v888 = vpow.pop %v887
  %v889 = vmul.f32 %v835, 1.442695
  %v890 = vpow.pop %v889
  %v891 = vmul.f32 %v836, 1.442695
  %v892 = vpow.pop %v891
  %v893 = vmul.f32 %v837, 1.442695
  %v894 = vpow.pop %v893
  %v895 = vmul.f32 %v838, 1.442695
  %v896 = vpow.pop %v895
  %v897 = vmul.f32 %v839, 1.442695
  %v898 = vpow.pop %v897
  %v899 = vmul.f32 %v840, 1.442695
  %v900 = vpow.pop %v899
  %v901 = vmul.f32 %v841, 1.442695
  %v902 = vpow.pop %v901
  %v903 = vmul.f32 %v842, 1.442695
  %v904 = vpow.pop %v903
  %v905 = vmul.f32 %v843, 1.442695
  %v906 = vpow.pop %v905
  %v907 = vmul.f32 %v844, 1.442695
  %v908 = vpow.pop %v907
  %v909 = vadd.f32 %v846, %v848
  %910 = vadd.xlane.f32.xlu0 %v909
  %v911 = vpop.xlane.xlu0 %910
  %v912 = vadd.f32 %v850, %v852
  %913 = vadd.xlane.f32.xlu0 %v912
  %v914 = vpop.xlane.xlu0 %913
  %v915 = vadd.f32 %v854, %v856
  %916 = vadd.xlane.f32.xlu0 %v915
  %v917 = vpop.xlane.xlu0 %916
  %v918 = vadd.f32 %v858, %v860
  %919 = vadd.xlane.f32.xlu0 %v918
  %v920 = vpop.xlane.xlu0 %919
  %v921 = vadd.f32 %v862, %v864
  %922 = vadd.xlane.f32.xlu0 %v921
  %v923 = vpop.xlane.xlu0 %922
  %v924 = vadd.f32 %v866, %v868
  %925 = vadd.xlane.f32.xlu0 %v924
  %v926 = vpop.xlane.xlu0 %925
  %v927 = vadd.f32 %v870, %v872
  %928 = vadd.xlane.f32.xlu0 %v927
  %v929 = vpop.xlane.xlu0 %928
  %v930 = vadd.f32 %v874, %v876
  %931 = vadd.xlane.f32.xlu0 %v930
  %v932 = vpop.xlane.xlu0 %931
  %v933 = vadd.f32 %v878, %v880
  %934 = vadd.xlane.f32.xlu0 %v933
  %v935 = vpop.xlane.xlu0 %934
  %v936 = vadd.f32 %v882, %v884
  %937 = vadd.xlane.f32.xlu0 %v936
  %v938 = vpop.xlane.xlu0 %937
  %v939 = vadd.f32 %v886, %v888
  %940 = vadd.xlane.f32.xlu0 %v939
  %v941 = vpop.xlane.xlu0 %940
  %v942 = vadd.f32 %v890, %v892
  %943 = vadd.xlane.f32.xlu0 %v942
  %v944 = vpop.xlane.xlu0 %943
  %v945 = vadd.f32 %v894, %v896
  %946 = vadd.xlane.f32.xlu0 %v945
  %v947 = vpop.xlane.xlu0 %946
  %v948 = vadd.f32 %v898, %v900
  %949 = vadd.xlane.f32.xlu0 %v948
  %v950 = vpop.xlane.xlu0 %949
  %v951 = vadd.f32 %v902, %v904
  %952 = vadd.xlane.f32.xlu0 %v951
  %v953 = vpop.xlane.xlu0 %952
  %v954 = vadd.f32 %v906, %v908
  %955 = vadd.xlane.f32.xlu0 %v954
  %v956 = vpop.xlane.xlu0 %955
  %v957 = vadd.f32 %v717, %v911
  %v958 = vadd.f32 %v718, %v914
  %v959 = vadd.f32 %v719, %v917
  %v960 = vadd.f32 %v720, %v920
  %v961 = vadd.f32 %v721, %v923
  %v962 = vadd.f32 %v722, %v926
  %v963 = vadd.f32 %v723, %v929
  %v964 = vadd.f32 %v724, %v932
  %v965 = vadd.f32 %v725, %v935
  %v966 = vadd.f32 %v726, %v938
  %v967 = vadd.f32 %v727, %v941
  %v968 = vadd.f32 %v728, %v944
  %v969 = vadd.f32 %v729, %v947
  %v970 = vadd.f32 %v730, %v950
  %v971 = vadd.f32 %v731, %v953
  %v972 = vadd.f32 %v732, %v956
  %vm973 = vcmask 7168
  %974 = vst.msk [vmem:[#allocation4] sm:$0xff] %vm973, %v957
  %975 = vst.msk [vmem:[#allocation4 + $0x8] sm:$0xff] %vm973, %v958
  %976 = vst.msk [vmem:[#allocation4 + $0x10] sm:$0xff] %vm973, %v959
  %977 = vst.msk [vmem:[#allocation4 + $0x18] sm:$0xff] %vm973, %v960
  %978 = vst.msk [vmem:[#allocation4 + $0x20] sm:$0xff] %vm973, %v961
  %979 = vst.msk [vmem:[#allocation4 + $0x28] sm:$0xff] %vm973, %v962
  %980 = vst.msk [vmem:[#allocation4 + $0x30] sm:$0xff] %vm973, %v963
  %981 = vst.msk [vmem:[#allocation4 + $0x38] sm:$0xff] %vm973, %v964
  %982 = vst.msk [vmem:[#allocation4 + $0x40] sm:$0xff] %vm973, %v965
  %983 = vst.msk [vmem:[#allocation4 + $0x48] sm:$0xff] %vm973, %v966
  %984 = vst.msk [vmem:[#allocation4 + $0x50] sm:$0xff] %vm973, %v967
  %985 = vst.msk [vmem:[#allocation4 + $0x58] sm:$0xff] %vm973, %v968
  %986 = vst.msk [vmem:[#allocation4 + $0x60] sm:$0xff] %vm973, %v969
  %987 = vst.msk [vmem:[#allocation4 + $0x68] sm:$0xff] %vm973, %v970
  %988 = vst.msk [vmem:[#allocation4 + $0x70] sm:$0xff] %vm973, %v971
  %989 = vst.msk [vmem:[#allocation4 + $0x78] sm:$0xff] %vm973, %v972
  %990 = vst.msk [vmem:[#allocation3] sm:$0xff] %vm973, %v637
  %991 = vst.msk [vmem:[#allocation3 + $0x8] sm:$0xff] %vm973, %v638
  %992 = vst.msk [vmem:[#allocation3 + $0x10] sm:$0xff] %vm973, %v639
  %993 = vst.msk [vmem:[#allocation3 + $0x18] sm:$0xff] %vm973, %v640
  %994 = vst.msk [vmem:[#allocation3 + $0x20] sm:$0xff] %vm973, %v641
  %995 = vst.msk [vmem:[#allocation3 + $0x28] sm:$0xff] %vm973, %v642
  %996 = vst.msk [vmem:[#allocation3 + $0x30] sm:$0xff] %vm973, %v643
  %997 = vst.msk [vmem:[#allocation3 + $0x38] sm:$0xff] %vm973, %v644
  %998 = vst.msk [vmem:[#allocation3 + $0x40] sm:$0xff] %vm973, %v645
  %999 = vst.msk [vmem:[#allocation3 + $0x48] sm:$0xff] %vm973, %v646
  %1000 = vst.msk [vmem:[#allocation3 + $0x50] sm:$0xff] %vm973, %v647
  %1001 = vst.msk [vmem:[#allocation3 + $0x58] sm:$0xff] %vm973, %v648
  %1002 = vst.msk [vmem:[#allocation3 + $0x60] sm:$0xff] %vm973, %v649
  %1003 = vst.msk [vmem:[#allocation3 + $0x68] sm:$0xff] %vm973, %v650
  %1004 = vst.msk [vmem:[#allocation3 + $0x70] sm:$0xff] %vm973, %v651
  %1005 = vst.msk [vmem:[#allocation3 + $0x78] sm:$0xff] %vm973, %v652
  // Predicated region
  $region26: #{fnnlm_forward.1} parent=0 // pred_check
    %p1006 = pneg %p21
  $region27: #{fnnlm_forward.1} parent=0 // pred_check_branch
    %1008 = sbr.rel (%p1006) target = $region29
  $region28: #{fnnlm_forward.1} parent=0 // pred_region
    %v1009 = vld [vmem:[%s5] sm:$0xff]
    %v1010 = vld [vmem:[%s5 + $0x8] sm:$0xff]
    %v1011 = vld [vmem:[%s5 + $0x10] sm:$0xff]
    %v1012 = vld [vmem:[%s5 + $0x18] sm:$0xff]
    %v1013 = vld [vmem:[%s5 + $0x20] sm:$0xff]
    %v1014 = vld [vmem:[%s5 + $0x28] sm:$0xff]
    %v1015 = vld [vmem:[%s5 + $0x30] sm:$0xff]
    %v1016 = vld [vmem:[%s5 + $0x38] sm:$0xff]
    %v1017 = vld [vmem:[%s5 + $0x40] sm:$0xff]
    %v1018 = vld [vmem:[%s5 + $0x48] sm:$0xff]
    %v1019 = vld [vmem:[%s5 + $0x50] sm:$0xff]
    %v1020 = vld [vmem:[%s5 + $0x58] sm:$0xff]
    %v1021 = vld [vmem:[%s5 + $0x60] sm:$0xff]
    %v1022 = vld [vmem:[%s5 + $0x68] sm:$0xff]
    %v1023 = vld [vmem:[%s5 + $0x70] sm:$0xff]
    %v1024 = vld [vmem:[%s5 + $0x78] sm:$0xff]
    %v1025 = vld [vmem:[%s5 + $0x80] sm:$0xff]
    %v1026 = vld [vmem:[%s5 + $0x88] sm:$0xff]
    %v1027 = vld [vmem:[%s5 + $0x90] sm:$0xff]
    %v1028 = vld [vmem:[%s5 + $0x98] sm:$0xff]
    %v1029 = vld [vmem:[%s5 + $0xa0] sm:$0xff]
    %v1030 = vld [vmem:[%s5 + $0xa8] sm:$0xff]
    %v1031 = vld [vmem:[%s5 + $0xb0] sm:$0xff]
    %v1032 = vld [vmem:[%s5 + $0xb8] sm:$0xff]
    %v1033 = vld [vmem:[%s5 + $0xc0] sm:$0xff]
    %v1034 = vld [vmem:[%s5 + $0xc8] sm:$0xff]
    %v1035 = vld [vmem:[%s5 + $0xd0] sm:$0xff]
    %v1036 = vld [vmem:[%s5 + $0xd8] sm:$0xff]
    %v1037 = vld [vmem:[%s5 + $0xe0] sm:$0xff]
    %v1038 = vld [vmem:[%s5 + $0xe8] sm:$0xff]
    %v1039 = vld [vmem:[%s5 + $0xf0] sm:$0xff]
    %v1040 = vld [vmem:[%s5 + $0xf8] sm:$0xff]
    %v1041 = vld [vmem:[#allocation3] sm:$0xff]
    %v1042 = vld [vmem:[#allocation3 + $0x8] sm:$0xff]
    %v1043 = vld [vmem:[#allocation3 + $0x10] sm:$0xff]
    %v1044 = vld [vmem:[#allocation3 + $0x18] sm:$0xff]
    %v1045 = vld [vmem:[#allocation3 + $0x20] sm:$0xff]
    %v1046 = vld [vmem:[#allocation3 + $0x28] sm:$0xff]
    %v1047 = vld [vmem:[#allocation3 + $0x30] sm:$0xff]
    %v1048 = vld [vmem:[#allocation3 + $0x38] sm:$0xff]
    %v1049 = vld [vmem:[#allocation3 + $0x40] sm:$0xff]
    %v1050 = vld [vmem:[#allocation3 + $0x48] sm:$0xff]
    %v1051 = vld [vmem:[#allocation3 + $0x50] sm:$0xff]
    %v1052 = vld [vmem:[#allocation3 + $0x58] sm:$0xff]
    %v1053 = vld [vmem:[#allocation3 + $0x60] sm:$0xff]
    %v1054 = vld [vmem:[#allocation3 + $0x68] sm:$0xff]
    %v1055 = vld [vmem:[#allocation3 + $0x70] sm:$0xff]
    %v1056 = vld [vmem:[#allocation3 + $0x78] sm:$0xff]
    %v1057 = vld [vmem:[#allocation4] sm:$0xff]
    %v1058 = vld [vmem:[#allocation4 + $0x8] sm:$0xff]
    %v1059 = vld [vmem:[#allocation4 + $0x10] sm:$0xff]
    %v1060 = vld [vmem:[#allocation4 + $0x18] sm:$0xff]
    %v1061 = vld [vmem:[#allocation4 + $0x20] sm:$0xff]
    %v1062 = vld [vmem:[#allocation4 + $0x28] sm:$0xff]
    %v1063 = vld [vmem:[#allocation4 + $0x30] sm:$0xff]
    %v1064 = vld [vmem:[#allocation4 + $0x38] sm:$0xff]
    %v1065 = vld [vmem:[#allocation4 + $0x40] sm:$0xff]
    %v1066 = vld [vmem:[#allocation4 + $0x48] sm:$0xff]
    %v1067 = vld [vmem:[#allocation4 + $0x50] sm:$0xff]
    %v1068 = vld [vmem:[#allocation4 + $0x58] sm:$0xff]
    %v1069 = vld [vmem:[#allocation4 + $0x60] sm:$0xff]
    %v1070 = vld [vmem:[#allocation4 + $0x68] sm:$0xff]
    %v1071 = vld [vmem:[#allocation4 + $0x70] sm:$0xff]
    %v1072 = vld [vmem:[#allocation4 + $0x78] sm:$0xff]
    %v1073 = vlog2.pop %v1057
    %v1074 = vmul.f32 %v1073, 0.6931472
    %v1075 = vlog2.pop %v1058
    %v1076 = vmul.f32 %v1075, 0.6931472
    %v1077 = vlog2.pop %v1059
    %v1078 = vmul.f32 %v1077, 0.6931472
    %v1079 = vlog2.pop %v1060
    %v1080 = vmul.f32 %v1079, 0.6931472
    %v1081 = vlog2.pop %v1061
    %v1082 = vmul.f32 %v1081, 0.6931472
    %v1083 = vlog2.pop %v1062
    %v1084 = vmul.f32 %v1083, 0.6931472
    %v1085 = vlog2.pop %v1063
    %v1086 = vmul.f32 %v1085, 0.6931472
    %v1087 = vlog2.pop %v1064
    %v1088 = vmul.f32 %v1087, 0.6931472
    %v1089 = vlog2.pop %v1065
    %v1090 = vmul.f32 %v1089, 0.6931472
    %v1091 = vlog2.pop %v1066
    %v1092 = vmul.f32 %v1091, 0.6931472
    %v1093 = vlog2.pop %v1067
    %v1094 = vmul.f32 %v1093, 0.6931472
    %v1095 = vlog2.pop %v1068
    %v1096 = vmul.f32 %v1095, 0.6931472
    %v1097 = vlog2.pop %v1069
    %v1098 = vmul.f32 %v1097, 0.6931472
    %v1099 = vlog2.pop %v1070
    %v1100 = vmul.f32 %v1099, 0.6931472
    %v1101 = vlog2.pop %v1071
    %v1102 = vmul.f32 %v1101, 0.6931472
    %v1103 = vlog2.pop %v1072
    %v1104 = vmul.f32 %v1103, 0.6931472
    %v1105 = vadd.f32 %v1041, %v1074
    %v1106 = vadd.f32 %v1042, %v1076
    %v1107 = vadd.f32 %v1043, %v1078
    %v1108 = vadd.f32 %v1044, %v1080
    %v1109 = vadd.f32 %v1045, %v1082
    %v1110 = vadd.f32 %v1046, %v1084
    %v1111 = vadd.f32 %v1047, %v1086
    %v1112 = vadd.f32 %v1048, %v1088
    %v1113 = vadd.f32 %v1049, %v1090
    %v1114 = vadd.f32 %v1050, %v1092
    %v1115 = vadd.f32 %v1051, %v1094
    %v1116 = vadd.f32 %v1052, %v1096
    %v1117 = vadd.f32 %v1053, %v1098
    %v1118 = vadd.f32 %v1054, %v1100
    %v1119 = vadd.f32 %v1055, %v1102
    %v1120 = vadd.f32 %v1056, %v1104
    %1122 = vset.pattern.permute.xlu0 0
    %1123 = vperm.xlu0 %1122, %v1105
    %v1124 = vpop.permute.xlu0 %1123
    %1127 = vset.pattern.permute.xlu0 0
    %1128 = vperm.xlu0 %1127, %v1106
    %v1129 = vpop.permute.xlu0 %1128
    %1132 = vset.pattern.permute.xlu0 0
    %1133 = vperm.xlu0 %1132, %v1107
    %v1134 = vpop.permute.xlu0 %1133
    %1137 = vset.pattern.permute.xlu0 0
    %1138 = vperm.xlu0 %1137, %v1108
    %v1139 = vpop.permute.xlu0 %1138
    %1142 = vset.pattern.permute.xlu0 0
    %1143 = vperm.xlu0 %1142, %v1109
    %v1144 = vpop.permute.xlu0 %1143
    %1147 = vset.pattern.permute.xlu0 0
    %1148 = vperm.xlu0 %1147, %v1110
    %v1149 = vpop.permute.xlu0 %1148
    %1152 = vset.pattern.permute.xlu0 0
    %1153 = vperm.xlu0 %1152, %v1111
    %v1154 = vpop.permute.xlu0 %1153
    %1157 = vset.pattern.permute.xlu0 0
    %1158 = vperm.xlu0 %1157, %v1112
    %v1159 = vpop.permute.xlu0 %1158
    %1162 = vset.pattern.permute.xlu0 0
    %1163 = vperm.xlu0 %1162, %v1113
    %v1164 = vpop.permute.xlu0 %1163
    %1167 = vset.pattern.permute.xlu0 0
    %1168 = vperm.xlu0 %1167, %v1114
    %v1169 = vpop.permute.xlu0 %1168
    %1172 = vset.pattern.permute.xlu0 0
    %1173 = vperm.xlu0 %1172, %v1115
    %v1174 = vpop.permute.xlu0 %1173
    %1177 = vset.pattern.permute.xlu0 0
    %1178 = vperm.xlu0 %1177, %v1116
    %v1179 = vpop.permute.xlu0 %1178
    %1182 = vset.pattern.permute.xlu0 0
    %1183 = vperm.xlu0 %1182, %v1117
    %v1184 = vpop.permute.xlu0 %1183
    %1187 = vset.pattern.permute.xlu0 0
    %1188 = vperm.xlu0 %1187, %v1118
    %v1189 = vpop.permute.xlu0 %1188
    %1192 = vset.pattern.permute.xlu0 0
    %1193 = vperm.xlu0 %1192, %v1119
    %v1194 = vpop.permute.xlu0 %1193
    %1197 = vset.pattern.permute.xlu0 0
    %1198 = vperm.xlu0 %1197, %v1120
    %v1199 = vpop.permute.xlu0 %1198
    %v1201 = vsub.f32 %v1009, %v1124
    %v1202 = vsub.f32 %v1010, %v1124
    %v1203 = vsub.f32 %v1011, %v1129
    %v1204 = vsub.f32 %v1012, %v1129
    %v1205 = vsub.f32 %v1013, %v1134
    %v1206 = vsub.f32 %v1014, %v1134
    %v1207 = vsub.f32 %v1015, %v1139
    %v1208 = vsub.f32 %v1016, %v1139
    %v1209 = vsub.f32 %v1017, %v1144
    %v1210 = vsub.f32 %v1018, %v1144
    %v1211 = vsub.f32 %v1019, %v1149
    %v1212 = vsub.f32 %v1020, %v1149
    %v1213 = vsub.f32 %v1021, %v1154
    %v1214 = vsub.f32 %v1022, %v1154
    %v1215 = vsub.f32 %v1023, %v1159
    %v1216 = vsub.f32 %v1024, %v1159
    %v1217 = vsub.f32 %v1025, %v1164
    %v1218 = vsub.f32 %v1026, %v1164
    %v1219 = vsub.f32 %v1027, %v1169
    %v1220 = vsub.f32 %v1028, %v1169
    %v1221 = vsub.f32 %v1029, %v1174
    %v1222 = vsub.f32 %v1030, %v1174
    %v1223 = vsub.f32 %v1031, %v1179
    %v1224 = vsub.f32 %v1032, %v1179
    %v1225 = vsub.f32 %v1033, %v1184
    %v1226 = vsub.f32 %v1034, %v1184
    %v1227 = vsub.f32 %v1035, %v1189
    %v1228 = vsub.f32 %v1036, %v1189
    %v1229 = vsub.f32 %v1037, %v1194
    %v1230 = vsub.f32 %v1038, %v1194
    %v1231 = vsub.f32 %v1039, %v1199
    %v1232 = vsub.f32 %v1040, %v1199
    %1233 = vst [vmem:[%s5] sm:$0xff] %v1201
    %1234 = vst [vmem:[%s5 + $0x8] sm:$0xff] %v1202
    %1235 = vst [vmem:[%s5 + $0x10] sm:$0xff] %v1203
    %1236 = vst [vmem:[%s5 + $0x18] sm:$0xff] %v1204
    %1237 = vst [vmem:[%s5 + $0x20] sm:$0xff] %v1205
    %1238 = vst [vmem:[%s5 + $0x28] sm:$0xff] %v1206
    %1239 = vst [vmem:[%s5 + $0x30] sm:$0xff] %v1207
    %1240 = vst [vmem:[%s5 + $0x38] sm:$0xff] %v1208
    %1241 = vst [vmem:[%s5 + $0x40] sm:$0xff] %v1209
    %1242 = vst [vmem:[%s5 + $0x48] sm:$0xff] %v1210
    %1243 = vst [vmem:[%s5 + $0x50] sm:$0xff] %v1211
    %1244 = vst [vmem:[%s5 + $0x58] sm:$0xff] %v1212
    %1245 = vst [vmem:[%s5 + $0x60] sm:$0xff] %v1213
    %1246 = vst [vmem:[%s5 + $0x68] sm:$0xff] %v1214
    %1247 = vst [vmem:[%s5 + $0x70] sm:$0xff] %v1215
    %1248 = vst [vmem:[%s5 + $0x78] sm:$0xff] %v1216
    %1249 = vst [vmem:[%s5 + $0x80] sm:$0xff] %v1217
    %1250 = vst [vmem:[%s5 + $0x88] sm:$0xff] %v1218
    %1251 = vst [vmem:[%s5 + $0x90] sm:$0xff] %v1219
    %1252 = vst [vmem:[%s5 + $0x98] sm:$0xff] %v1220
    %1253 = vst [vmem:[%s5 + $0xa0] sm:$0xff] %v1221
    %1254 = vst [vmem:[%s5 + $0xa8] sm:$0xff] %v1222
    %1255 = vst [vmem:[%s5 + $0xb0] sm:$0xff] %v1223
    %1256 = vst [vmem:[%s5 + $0xb8] sm:$0xff] %v1224
    %1257 = vst [vmem:[%s5 + $0xc0] sm:$0xff] %v1225
    %1258 = vst [vmem:[%s5 + $0xc8] sm:$0xff] %v1226
    %1259 = vst [vmem:[%s5 + $0xd0] sm:$0xff] %v1227
    %1260 = vst [vmem:[%s5 + $0xd8] sm:$0xff] %v1228
    %1261 = vst [vmem:[%s5 + $0xe0] sm:$0xff] %v1229
    %1262 = vst [vmem:[%s5 + $0xe8] sm:$0xff] %v1230
    %1263 = vst [vmem:[%s5 + $0xf0] sm:$0xff] %v1231
    %1264 = vst [vmem:[%s5 + $0xf8] sm:$0xff] %v1232
  $region29: #{fnnlm_forward.1} parent=0 // pred_fallthru
    _
  // Predicated region
  $region30: #{fnnlm_forward.1} parent=0 // pred_check
    _
  $region31: #{fnnlm_forward.1} parent=0 // pred_check_branch
    %1266 = sbr.rel (0) target = $region33
  $region32: #{fnnlm_forward.1} parent=0 // pred_region
    _
  $region33: #{fnnlm_forward.1} parent=0 // pred_fallthru
    _
  // Predicated region
  $region34: #{fnnlm_forward.1} parent=0 // pred_check
    _
  $region35: #{fnnlm_forward.1} parent=0 // pred_check_branch
    %1268 = sbr.rel (0) target = $region37
  $region36: #{fnnlm_forward.1} parent=0 // pred_region
    _
  $region37: #{fnnlm_forward.1} parent=0 // pred_fallthru
    _

</llo_original>
